<compile_context>
chip_gen: v7x
topology: tpu7x:2x2x1
jax: 0.10.0
libtpu: 0.0.40
codegen_flags: <defaults>
</compile_context>

<pallas_src>
import jax
import jax.numpy as jnp
from jax.experimental import pallas as pl
from jax.experimental.pallas import tpu as pltpu

LANES = 128            # TPU vreg lane width (fast axis)
SUBLANES = 8           # f32 vreg sublane count (slow axis)
BLOCK_BYTES = 8 << 20  # ~8 MiB per block per ref -> 4x (in+out, dbl-buffered) = 32 MiB
VMEM_LIMIT = 48 << 20  # headroom above 32 MiB live; fits v7x's 64 MiB physical VMEM


# ---- Pallas kernel ----------------------------------------------------------
def _hsigmoid_kernel(x_ref, o_ref):
    # relu6(x + 3) * (1/6), computed in f32, stored back in the output dtype.
    x = x_ref[...].astype(jnp.float32)
    y = jnp.clip(x + 3.0, 0.0, 6.0) * (1.0 / 6.0)
    o_ref[...] = y.astype(o_ref.dtype)


# ---- tiling choice ----------------------------------------------------------
def _choose_tiling(rows, itemsize):
    """Pick (block_rows, num_grid_steps) for a (rows, 128) slab."""
    # Sublane alignment for the native packed tile (8 for f32, 16 for bf16, ...).
    align = max(SUBLANES, 32 // max(1, itemsize))
    max_rows = max(align, (BLOCK_BYTES // (itemsize * LANES)) // align * align)

    if rows <= max_rows:
        # Single block covering the whole slab (block shape == full array dims,
        # so no (8,128) divisibility requirement).  No split on single-TC chips.
        return rows, 1

    # Need to split: use >= 4 steps and an even count so both v7x TensorCores
    # get >= 2 blocks each (pipelined); blocks stay multi-MiB since the slab
    # is already > BLOCK_BYTES.
    num = pl.cdiv(rows, max_rows)
    num = max(num, 4)
    if num % 2:
        num += 1
    blk = pl.cdiv(rows, num)
    blk = ((blk + align - 1) // align) * align
    num = pl.cdiv(rows, blk)          # Pallas masks the ragged trailing block
    return blk, num


# ---- wrapper ----------------------------------------------------------------
def hsigmoid_pallas(x):
    orig_shape = x.shape
    dtype = x.dtype
    itemsize = jnp.dtype(dtype).itemsize
    total = x.size

    rows = pl.cdiv(total, LANES)
    padded_total = rows * LANES

    flat = x.reshape(-1)
    if padded_total != total:
        # Rare path: pad only the <=127-element lane tail.
        flat = jnp.pad(flat, (0, padded_total - total))
    slab = flat.reshape(rows, LANES)          # lane-dense 2-D layout

    blk, num = _choose_tiling(rows, itemsize)

    out = pl.pallas_call(
        _hsigmoid_kernel,
        out_shape=jax.ShapeDtypeStruct((rows, LANES), dtype),
        grid_spec=pltpu.PrefetchScalarGridSpec(
            num_scalar_prefetch=0,
            grid=(num,),
            in_specs=[pl.BlockSpec((blk, LANES), lambda i: (i, 0))],
            out_specs=pl.BlockSpec((blk, LANES), lambda i: (i, 0)),
        ),
        compiler_params=pltpu.CompilerParams(
            dimension_semantics=("parallel",),
            vmem_limit_bytes=VMEM_LIMIT,
        ),
        cost_estimate=pl.CostEstimate(
            flops=4 * padded_total,
            transcendentals=0,
            bytes_accessed=2 * padded_total * itemsize,
        ),
    )(slab)

    if padded_total != total:
        return out.reshape(-1)[:total].reshape(orig_shape)
    return out.reshape(orig_shape)


# ---- pure-JAX reference (matches the PyTorch forward) ------------------------
def hsigmoid_ref(x):
    return jnp.clip(x + 3.0, 0.0, 6.0) * (1.0 / 6.0)


if __name__ == "__main__":
    key = jax.random.PRNGKey(0)
    # Small NCHW input consistent with the module's usage inside MobileNetV3.
    # Scale so values land on both sides of the relu6 clip points.
    x = jax.random.normal(key, (2, 4, 16, 16), jnp.float32) * 3.0

    out = hsigmoid_pallas(x)
    out = jax.block_until_ready(out)

    ref = hsigmoid_ref(x)
    err = float(jnp.max(jnp.abs(out - ref)))
    if out.shape != ref.shape or err > 1e-6:
        raise AssertionError(
            f"mismatch: shape {out.shape} vs {ref.shape}, max abs err {err}")
    print("KERNEL_OK")
</pallas_src>

<mosaic_0001>
module attributes {stable_mosaic.version = 11 : i64} {
  func.func @_hsigmoid_kernel(%arg0: i32, %arg1: memref<16x128xf32, #tpu.memory_space<vmem>>, %arg2: memref<16x128xf32, #tpu.memory_space<vmem>>) attributes {dimension_semantics = [#tpu.dimension_semantics<parallel>], iteration_bounds = array<i64: 1>, scalar_prefetch = 0 : i64, scratch_operands = 0 : i64, tpu.core_type = #tpu.core_type<tc>, window_params = [{transform_indices = @transform_0, window_bounds = array<i64: 16, 128>}, {transform_indices = @transform_1, window_bounds = array<i64: 16, 128>}]} {
    %c0 = arith.constant 0 : index
    %c0_0 = arith.constant 0 : index
    %0 = vector.load %arg1[%c0, %c0_0] : memref<16x128xf32, #tpu.memory_space<vmem>>, vector<16x128xf32>
    %cst = arith.constant 3.000000e+00 : f32
    %1 = vector.broadcast %cst : f32 to vector<16x128xf32>
    %2 = arith.addf %0, %1 : vector<16x128xf32>
    %cst_1 = arith.constant 0.000000e+00 : f32
    %cst_2 = arith.constant 6.000000e+00 : f32
    %3 = vector.broadcast %cst_1 : f32 to vector<16x128xf32>
    %4 = arith.maximumf %3, %2 : vector<16x128xf32>
    %5 = vector.broadcast %cst_2 : f32 to vector<16x128xf32>
    %6 = arith.minimumf %5, %4 : vector<16x128xf32>
    %cst_3 = arith.constant 0.166666672 : f32
    %7 = vector.broadcast %cst_3 : f32 to vector<16x128xf32>
    %8 = arith.mulf %6, %7 : vector<16x128xf32>
    %c0_4 = arith.constant 0 : index
    %c0_5 = arith.constant 0 : index
    %9 = vector.load %arg2[%c0_4, %c0_5] : memref<16x128xf32, #tpu.memory_space<vmem>>, vector<16x128xf32>
    tpu.vector_store %arg2[%c0_4, %c0_5], %8 {strides = array<i32>} : memref<16x128xf32, #tpu.memory_space<vmem>>, vector<16x128xf32>,
    return
  }
  func.func @transform_0(%arg0: i32) -> (i32, i32) {
    %c0_i32 = arith.constant 0 : i32
    %c0_i32_0 = arith.constant 0 : i32
    return %arg0, %c0_i32 : i32, i32
  }
  func.func @transform_1(%arg0: i32) -> (i32, i32) {
    %c0_i32 = arith.constant 0 : i32
    %c0_i32_0 = arith.constant 0 : i32
    return %arg0, %c0_i32 : i32, i32
  }
}

</mosaic_0001>

<llo_original>
// kernel: tpu_custom_call.1
$region0: #{tpu_custom_call.1}
  #allocation0 [shape = 'u32[]', space=smem, size = 0x4, offset = 0x4, fixed_abs, tag = 'smem constant byte address 0x4 - core index']
  #allocation1 [shape = 'u32[144,128]{1,0:T(1,128)}', space=vmem, size = 0x12000, scoped, tag = 'internal scratch']
  %s0 = inlined_call_operand.hbm [shape: f32[16,128], index: 0, kind: input, shape index: {}]
  %s1 = inlined_call_operand.hbm [shape: f32[16,128], index: 1, kind: output, shape index: {}]
  %s2 = sld [smem:[#allocation0]]
  $region18: #{tpu_custom_call.1} parent=0
    _
  %s4 = ssub.s32 1, %s2
  %s5 = scalar_select 0, %s4, %s2
  $region1: #{tpu_custom_call.1} parent=0
    #allocation2 [shape = 'u8[8192]{0}', space=vmem, size = 0x2000, scoped, tag = 'input window, operand 0, single buffered']
    #allocation3 [shape = 's32[1]{0}', space=sflag, size = 0x4, scoped, tag = 'scoped memory for tpu_custom_call.1']
    #allocation4 [shape = 's32[1]{0}', space=sflag, size = 0x4, scoped, tag = 'scoped memory for tpu_custom_call.1']
    #allocation5 [shape = 'u8[8192]{0}', space=vmem, size = 0x2000, scoped, tag = 'output window, operand 0, single buffered']
    %6 = vsyncpa [#allocation3], 0
    %7 = vsyncpa [#allocation4], 0
    // Predicated region
    $region2: #{tpu_custom_call.1} parent=1 // pred_check
      _
    $region3: #{tpu_custom_call.1} parent=1 // pred_check_branch
      %9 = sbr.rel (0) target = $region5
    $region4: #{tpu_custom_call.1} parent=1 // pred_region
      %s11 = ssub.s32 256, 256
      %12 = vsyncadd [#allocation3], %s11
      %s13 = sshll.u32 [#allocation2], 4
      %s14 = int_to_ptr.vmem [resolvable:$true] %s13
      %19 = dma.hbm_to_vmem [thread:$0]  %s0, 256, %s14, [#allocation3], 128, 128, 8
    $region5: #{tpu_custom_call.1} parent=1 // pred_fallthru
      _
    // Predicated region
    $region6: #{tpu_custom_call.1} parent=1 // pred_check
      _
    $region7: #{tpu_custom_call.1} parent=1 // pred_check_branch
      %21 = sbr.rel (0) target = $region9
    $region8: #{tpu_custom_call.1} parent=1 // pred_region
      %22 = dma.done [#allocation3], 256
    $region9: #{tpu_custom_call.1} parent=1 // pred_fallthru
      _
    %v23 = vld [vmem:[#allocation2] sm:$0xff]
    %v24 = vld [vmem:[#allocation2 + $0x8] sm:$0xff]
    %v25 = vadd.f32 %v23, 3.0
    %v26 = vadd.f32 %v24, 3.0
    %v27 = vmax.f32 %v25, 0.0
    %v28 = vmax.f32 %v26, 0.0
    %v29 = vmin.f32 %v27, 6.0
    %v30 = vmin.f32 %v28, 6.0
    %v31 = vmul.f32 %v29, 0.16666667
    %v32 = vmul.f32 %v30, 0.16666667
    %33 = vst [vmem:[#allocation5] sm:$0xff] %v31
    %34 = vst [vmem:[#allocation5 + $0x8] sm:$0xff] %v32
    // Predicated region
    $region10: #{tpu_custom_call.1} parent=1 // pred_check
      _
    $region11: #{tpu_custom_call.1} parent=1 // pred_check_branch
      %36 = sbr.rel (0) target = $region13
    $region12: #{tpu_custom_call.1} parent=1 // pred_region
      %s38 = ssub.s32 256, 256
      %39 = vsyncadd [#allocation4], %s38
      %s40 = sshll.u32 [#allocation5], 4
      %s41 = int_to_ptr.vmem [resolvable:$true] %s40
      %46 = dma.vmem_to_hbm [thread:$0]  %s41, 256, %s1, [#allocation4], 128, 128, 8
    $region13: #{tpu_custom_call.1} parent=1 // pred_fallthru
      _
    // Predicated region
    $region14: #{tpu_custom_call.1} parent=1 // pred_check
      _
    $region15: #{tpu_custom_call.1} parent=1 // pred_check_branch
      %48 = sbr.rel (0) target = $region17
    $region16: #{tpu_custom_call.1} parent=1 // pred_region
      %49 = dma.done [#allocation4], 256
    $region17: #{tpu_custom_call.1} parent=1 // pred_fallthru
      _
    %50 = vsyncpa [#allocation3], 1
    %51 = vsyncpa [#allocation4], 1

</llo_original>
